<compile_context>
chip_gen: v6e
topology: v6e:2x2x1
jax: 0.10.0
libtpu: 0.0.40
codegen_flags: <defaults>
</compile_context>

<pallas_src>
import functools

import jax
import jax.numpy as jnp
import numpy as np
from jax.experimental import pallas as pl
from jax.experimental.pallas import tpu as pltpu


# ----------------------------- Pallas kernels -------------------------------

def _token_fused_kernel(p_ref, w_ref, b_ref, t_ref, o_ref):
    # p: (tm, P*K)  packed patches            (compute dtype, e.g. bf16)
    # w: (P*K, P*D) block-diagonal weight     (compute dtype)
    # b: (1, P*D)   bias tiled P times        (f32)
    # t: (tm, P*D)  packed repeated time emb  (f32)
    # o: (tm, P*D)  packed output             (f32)
    acc = jnp.dot(p_ref[...], w_ref[...], preferred_element_type=jnp.float32)
    o_ref[...] = (acc + b_ref[...] + t_ref[...]).astype(o_ref.dtype)


def _token_kernel(p_ref, w_ref, b_ref, o_ref):
    acc = jnp.dot(p_ref[...], w_ref[...], preferred_element_type=jnp.float32)
    o_ref[...] = (acc + b_ref[...]).astype(o_ref.dtype)


def _round_up(x, m):
    return ((x + m - 1) // m) * m


def token_embedding_fused(patches, w, b, time_rep=None, *,
                          compute_dtype=jnp.bfloat16,
                          out_dtype=jnp.float32,
                          tile_rows=512):
    """out[m, :] = patches[m, :] @ w + b (+ time_rep[m, :]), with lane-dense stores.

    P = 128 // D consecutive output rows are packed into one stored row (pure
    row-major reshape) using a block-diagonal weight, so every MXU pass and every
    store uses the full 128-lane width.  Falls back to P = 1 if D does not divide
    128 or M is not divisible by P.
    """
    M, K = patches.shape
    Kw, D = w.shape
    assert K == Kw

    P = 128 // D if (D <= 128 and 128 % D == 0) else 1
    if M % P != 0:
        P = 1
    Mp, Kp, Dp = M // P, K * P, D * P

    # Block-diagonal weight / tiled bias so P packed rows come out of one matmul.
    eye_p = jnp.eye(P, dtype=compute_dtype)
    w_bd = jnp.einsum("pq,kd->pkqd", eye_p,
                      w.astype(compute_dtype)).reshape(Kp, Dp)
    b_tiled = jnp.tile(b.astype(jnp.float32).reshape(1, D), (1, P))
    p_packed = patches.reshape(Mp, Kp).astype(compute_dtype)

    # Large row tiles amortize the ~0.35us per-grid-step overhead; double-buffered
    # (tm,Kp)+(tm,Dp)(+time)+(tm,Dp) at tm=512 is well below the 32 MiB scoped /
    # 64 MiB physical VMEM of v7x, so no vmem_limit override is needed.
    tm = min(tile_rows, _round_up(Mp, 16))
    grid = (pl.cdiv(Mp, tm),)

    in_specs = [
        pl.BlockSpec((tm, Kp), lambda i: (i, 0)),
        pl.BlockSpec((Kp, Dp), lambda i: (0, 0)),
        pl.BlockSpec((1, Dp), lambda i: (0, 0)),
    ]
    args = [p_packed, w_bd, b_tiled]
    kernel = _token_kernel
    if time_rep is not None:
        t_packed = time_rep.reshape(Mp, Dp).astype(jnp.float32)
        in_specs.append(pl.BlockSpec((tm, Dp), lambda i: (i, 0)))
        args.append(t_packed)
        kernel = _token_fused_kernel

    out = pl.pallas_call(
        kernel,
        out_shape=jax.ShapeDtypeStruct((Mp, Dp), out_dtype),
        grid_spec=pltpu.PrefetchScalarGridSpec(
            num_scalar_prefetch=0,
            grid=grid,
            in_specs=in_specs,
            out_specs=pl.BlockSpec((tm, Dp), lambda i: (i, 0)),
        ),
        compiler_params=pltpu.CompilerParams(
            dimension_semantics=("parallel",)),   # lets v7x shard steps over 2 TCs
    )(*args)
    return out.reshape(M, D)


# --------------------------- parameter construction -------------------------

def init_params(key, c_in, d_model, t_patch, patch, hour_size=48, weekday_size=7):
    k1, k2, k3, k4, k5, k6 = jax.random.split(key, 6)
    fan_in_tok = c_in * t_patch * patch * patch
    # kaiming_normal_(fan_in, leaky_relu, a=0) -> std = sqrt(2 / fan_in)
    tok_w_conv = jax.random.normal(k1, (d_model, c_in, t_patch, patch, patch),
                                   jnp.float32) * np.sqrt(2.0 / fan_in_tok)
    tok_b = jax.random.uniform(k2, (d_model,), jnp.float32,
                               -1.0 / np.sqrt(fan_in_tok), 1.0 / np.sqrt(fan_in_tok))
    hour_emb = jax.random.normal(k3, (hour_size, d_model), jnp.float32)
    weekday_emb = jax.random.normal(k4, (weekday_size, d_model), jnp.float32)
    fan_in_time = d_model * t_patch
    time_w_conv = jax.random.uniform(k5, (d_model, d_model, t_patch), jnp.float32,
                                     -1.0 / np.sqrt(fan_in_time), 1.0 / np.sqrt(fan_in_time))
    time_b = jax.random.uniform(k6, (d_model,), jnp.float32,
                                -1.0 / np.sqrt(fan_in_time), 1.0 / np.sqrt(fan_in_time))
    return {
        # Conv3d weight (O, I, kt, kh, kw) flattened to (I*kt*kh*kw, O) matching
        # the patch flattening order (C, kt, kh, kw)
        "tok_w": tok_w_conv.reshape(d_model, -1).T,
        "tok_b": tok_b,
        "hour_emb": hour_emb,
        "weekday_emb": weekday_emb,
        # Conv1d weight (O, I, kt) -> (kt, I, O) -> (kt*I, O) matching patch order (kt, d)
        "time_w": jnp.transpose(time_w_conv, (2, 1, 0)).reshape(t_patch * d_model, d_model),
        "time_b": time_b,
        # raw conv-layout weights kept only for the pure-JAX reference
        "_tok_w_conv": tok_w_conv,
        "_time_w_conv": time_w_conv,
    }


# ------------------------------- forward pass --------------------------------

def data_embedding_forward(params, x, x_mark, t_patch, patch, is_time=1,
                           compute_dtype=jnp.bfloat16):
    """Returns (x_out, TimeEmb_repeated) exactly like DataEmbedding.forward (eval)."""
    N, C, T, H, W = x.shape
    Tp, Hp, Wp = T // t_patch, H // patch, W // patch
    S = Hp * Wp
    D = params["tok_b"].shape[0]
    M = N * Tp * S

    # ---- patchify for Conv3d(kernel == stride) (XLA glue) ----
    # TODO(synk): this transpose costs one extra HBM pass over x; fusing it into the
    # pallas_call input DMA (allow_input_fusion / index_map patchify) is possible but
    # kept out to preserve a plain 2-D input tile.
    xp = x.astype(compute_dtype)
    patches = xp.reshape(N, C, Tp, t_patch, Hp, patch, Wp, patch)
    patches = patches.transpose(0, 2, 4, 6, 1, 3, 5, 7)   # (N,T',H',W', C,kt,kh,kw)
    patches = patches.reshape(M, C * t_patch * patch * patch)

    # ---- TemporalEmbedding: gathers + Conv1d(kernel == stride) as a tiny matmul ----
    # (N*T', t_patch*D) @ (t_patch*D, D) is a few KiB; a dedicated pallas_call would
    # be dominated by launch/pipeline fixed cost, so XLA handles it (per perf review).
    x_mark = x_mark.astype(jnp.int32)
    hour_x = jnp.take(params["hour_emb"], x_mark[:, :, 1], axis=0)       # (N, T, D)
    weekday_x = jnp.take(params["weekday_emb"], x_mark[:, :, 0], axis=0)  # (N, T, D)
    emb = (hour_x + weekday_x).reshape(N * Tp, t_patch * D)
    time = jnp.dot(emb, params["time_w"],
                   preferred_element_type=jnp.float32) + params["time_b"]
    time = time.reshape(N, Tp, D)

    # repeat_interleave(TimeEmb, S, dim=1): required as a module output either way.
    time_rep = jnp.repeat(time, S, axis=1)                                # (N, T'*S, D)

    # ---- fused TokenEmbedding matmul + bias (+ broadcast time add), one kernel ----
    if is_time == 1:
        out = token_embedding_fused(patches, params["tok_w"], params["tok_b"],
                                    time_rep.reshape(M, D),
                                    compute_dtype=compute_dtype)
    else:
        out = token_embedding_fused(patches, params["tok_w"], params["tok_b"],
                                    None, compute_dtype=compute_dtype)
    out = out.reshape(N, Tp * S, D)

    # TODO(synk): nn.Dropout is identity in eval mode; training path not implemented.
    return out, time_rep


# ------------------------------ pure-JAX reference ----------------------------

def reference_forward(params, x, x_mark, t_patch, patch):
    N, C, T, H, W = x.shape
    D = params["tok_b"].shape[0]
    conv3 = jax.lax.conv_general_dilated(
        x, params["_tok_w_conv"], window_strides=(t_patch, patch, patch),
        padding="VALID", dimension_numbers=("NCDHW", "OIDHW", "NCDHW"))
    conv3 = conv3 + params["tok_b"].reshape(1, D, 1, 1, 1)
    Np, Dm, Tp, Hp, Wp = conv3.shape
    tok = conv3.reshape(Np, Dm, Tp, Hp * Wp)
    tok = jnp.einsum("ncts->ntsc", tok).reshape(Np, -1, Dm)

    x_mark = x_mark.astype(jnp.int32)
    emb = (jnp.take(params["hour_emb"], x_mark[:, :, 1], axis=0)
           + jnp.take(params["weekday_emb"], x_mark[:, :, 0], axis=0))     # (N, T, D)
    conv1 = jax.lax.conv_general_dilated(
        jnp.transpose(emb, (0, 2, 1)), params["_time_w_conv"],
        window_strides=(t_patch,), padding="VALID",
        dimension_numbers=("NCH", "OIH", "NCH"))
    time = jnp.transpose(conv1, (0, 2, 1)) + params["time_b"]              # (N, T', D)

    rep = tok.shape[1] // time.shape[1]
    time_rep = jnp.repeat(time, rep, axis=1)
    return tok + time_rep, time_rep


# ------------------------------------ main ------------------------------------

if __name__ == "__main__":
    # small, shape-consistent config
    N, C_in, T, H, W = 2, 2, 8, 8, 8
    d_model, t_patch, patch = 32, 2, 2
    hour_size, weekday_size = 48, 7

    key = jax.random.PRNGKey(0)
    kp, kx, kh, kw = jax.random.split(key, 4)

    params = init_params(kp, C_in, d_model, t_patch, patch, hour_size, weekday_size)
    x = jax.random.normal(kx, (N, C_in, T, H, W), jnp.float32)
    x_mark = jnp.stack(
        [jax.random.randint(kw, (N, T), 0, weekday_size),
         jax.random.randint(kh, (N, T), 0, hour_size)], axis=-1).astype(jnp.int32)

    ref_out, ref_time = reference_forward(params, x, x_mark, t_patch, patch)
    ref_out = np.asarray(ref_out)
    ref_time = np.asarray(ref_time)

    # 1) f32 compute path: exact check against the lax.conv reference.
    fwd_f32 = jax.jit(functools.partial(
        data_embedding_forward, t_patch=t_patch, patch=patch, is_time=1,
        compute_dtype=jnp.float32))
    out32, time32 = fwd_f32(params, x, x_mark)
    out32 = jax.block_until_ready(out32)
    time32 = jax.block_until_ready(time32)
    np.testing.assert_allclose(np.asarray(out32), ref_out, rtol=1e-4, atol=1e-4)
    np.testing.assert_allclose(np.asarray(time32), ref_time, rtol=1e-4, atol=1e-4)

    # 1b) is_time=0 path (token embedding only) with the no-time kernel variant.
    fwd_f32_notime = jax.jit(functools.partial(
        data_embedding_forward, t_patch=t_patch, patch=patch, is_time=0,
        compute_dtype=jnp.float32))
    out_nt, _ = fwd_f32_notime(params, x, x_mark)
    out_nt = jax.block_until_ready(out_nt)
    np.testing.assert_allclose(np.asarray(out_nt), ref_out - ref_time,
                               rtol=1e-4, atol=1e-4)

    # 2) bf16 fast path (the performance default on v5e/v6e/v7x): loose tolerance,
    #    f32 accumulate + f32 bias/time adds keep the error to bf16 input rounding.
    fwd_bf16 = jax.jit(functools.partial(
        data_embedding_forward, t_patch=t_patch, patch=patch, is_time=1,
        compute_dtype=jnp.bfloat16))
    out_bf, time_bf = fwd_bf16(params, x, x_mark)
    out_bf = jax.block_until_ready(out_bf)
    time_bf = jax.block_until_ready(time_bf)
    np.testing.assert_allclose(np.asarray(out_bf), ref_out, rtol=5e-2, atol=5e-2)
    np.testing.assert_allclose(np.asarray(time_bf), ref_time, rtol=1e-4, atol=1e-4)

    print("KERNEL_OK")
</pallas_src>

<mosaic_0001>
module attributes {stable_mosaic.version = 11 : i64} {
  func.func @_token_fused_kernel(%arg0: i32, %arg1: memref<32x64xf32, #tpu.memory_space<vmem>>, %arg2: memref<64x128xf32, #tpu.memory_space<vmem>>, %arg3: memref<1x128xf32, #tpu.memory_space<vmem>>, %arg4: memref<32x128xf32, #tpu.memory_space<vmem>>, %arg5: memref<32x128xf32, #tpu.memory_space<vmem>>) attributes {dimension_semantics = [#tpu.dimension_semantics<parallel>], iteration_bounds = array<i64: 1>, scalar_prefetch = 0 : i64, scratch_operands = 0 : i64, tpu.core_type = #tpu.core_type<tc>, window_params = [{transform_indices = @transform_0, window_bounds = array<i64: 32, 64>}, {pipeline_mode = #tpu.pipeline_mode<synchronous>, transform_indices = @transform_1, window_bounds = array<i64: 64, 128>}, {pipeline_mode = #tpu.pipeline_mode<synchronous>, transform_indices = @transform_2, window_bounds = array<i64: 1, 128>}, {transform_indices = @transform_3, window_bounds = array<i64: 32, 128>}, {transform_indices = @transform_4, window_bounds = array<i64: 32, 128>}]} {
    %c0 = arith.constant 0 : index
    %c0_0 = arith.constant 0 : index
    %0 = vector.load %arg1[%c0, %c0_0] : memref<32x64xf32, #tpu.memory_space<vmem>>, vector<32x64xf32>
    %c0_1 = arith.constant 0 : index
    %c0_2 = arith.constant 0 : index
    %1 = vector.load %arg2[%c0_1, %c0_2] : memref<64x128xf32, #tpu.memory_space<vmem>>, vector<64x128xf32>
    %cst = arith.constant dense<0.000000e+00> : vector<32x128xf32>
    %2 = tpu.matmul %0, %1, %cst {dimension_numbers = #tpu.dot_dimension_numbers<[1], [0], [0], [1], [0, 0, 1, 1], [], []>} : vector<32x64xf32>, vector<64x128xf32>, vector<32x128xf32> -> vector<32x128xf32>
    %c0_3 = arith.constant 0 : index
    %c0_4 = arith.constant 0 : index
    %3 = vector.load %arg3[%c0_3, %c0_4] : memref<1x128xf32, #tpu.memory_space<vmem>>, vector<1x128xf32>
    %4 = vector.broadcast %3 : vector<1x128xf32> to vector<32x128xf32>
    %5 = arith.addf %2, %4 : vector<32x128xf32>
    %c0_5 = arith.constant 0 : index
    %c0_6 = arith.constant 0 : index
    %6 = vector.load %arg4[%c0_5, %c0_6] : memref<32x128xf32, #tpu.memory_space<vmem>>, vector<32x128xf32>
    %7 = arith.addf %5, %6 : vector<32x128xf32>
    %c0_7 = arith.constant 0 : index
    %c0_8 = arith.constant 0 : index
    %8 = vector.load %arg5[%c0_7, %c0_8] : memref<32x128xf32, #tpu.memory_space<vmem>>, vector<32x128xf32>
    tpu.vector_store %arg5[%c0_7, %c0_8], %7 {strides = array<i32>} : memref<32x128xf32, #tpu.memory_space<vmem>>, vector<32x128xf32>,
    return
  }
  func.func @transform_0(%arg0: i32) -> (i32, i32) {
    %c0_i32 = arith.constant 0 : i32
    %c0_i32_0 = arith.constant 0 : i32
    return %arg0, %c0_i32 : i32, i32
  }
  func.func @transform_1(%arg0: i32) -> (i32, i32) {
    %c0_i32 = arith.constant 0 : i32
    %c0_i32_0 = arith.constant 0 : i32
    %c0_i32_1 = arith.constant 0 : i32
    return %c0_i32, %c0_i32_0 : i32, i32
  }
  func.func @transform_2(%arg0: i32) -> (i32, i32) {
    %c0_i32 = arith.constant 0 : i32
    %c0_i32_0 = arith.constant 0 : i32
    %c0_i32_1 = arith.constant 0 : i32
    return %c0_i32, %c0_i32_0 : i32, i32
  }
  func.func @transform_3(%arg0: i32) -> (i32, i32) {
    %c0_i32 = arith.constant 0 : i32
    %c0_i32_0 = arith.constant 0 : i32
    return %arg0, %c0_i32 : i32, i32
  }
  func.func @transform_4(%arg0: i32) -> (i32, i32) {
    %c0_i32 = arith.constant 0 : i32
    %c0_i32_0 = arith.constant 0 : i32
    return %arg0, %c0_i32 : i32, i32
  }
}

</mosaic_0001>

<llo_original>
// kernel: data_embedding_forward.1
$region0: #{data_embedding_forward.1}
  #allocation0 [shape = 'u32[]', space=smem, size = 0x4, offset = 0x4, fixed_abs, tag = 'smem constant byte address 0x4 - core index']
  #allocation1 [shape = 'u32[144,128]{1,0:T(1,128)}', space=vmem, size = 0x12000, scoped, tag = 'internal scratch']
  %s0 = inlined_call_operand.vmem [shape: f32[32,64], index: 0, kind: input, shape index: {}]
  %s1 = inlined_call_operand.vmem [shape: f32[64,128], index: 1, kind: input, shape index: {}]
  %s2 = inlined_call_operand.vmem [shape: f32[1,128], index: 2, kind: input, shape index: {}]
  %s3 = inlined_call_operand.vmem [shape: f32[32,128], index: 3, kind: input, shape index: {}]
  %s4 = inlined_call_operand.vmem [shape: f32[32,128], index: 4, kind: output, shape index: {}]
  %s5 = sld [smem:[#allocation0]]
  $region26: #{data_embedding_forward.1} parent=0
    _
  %s7 = ssub.s32 1, %s5
  %s8 = scalar_select 0, %s7, %s5
  // Predicated region
  $region2: #{data_embedding_forward.1} parent=0 // pred_check
    _
  $region3: #{data_embedding_forward.1} parent=0 // pred_check_branch
    %10 = sbr.rel (0) target = $region5
  $region4: #{data_embedding_forward.1} parent=0 // pred_region
    _
  $region5: #{data_embedding_forward.1} parent=0 // pred_fallthru
    _
  // Predicated region
  $region6: #{data_embedding_forward.1} parent=0 // pred_check
    _
  $region7: #{data_embedding_forward.1} parent=0 // pred_check_branch
    %12 = sbr.rel (0) target = $region9
  $region8: #{data_embedding_forward.1} parent=0 // pred_region
    _
  $region9: #{data_embedding_forward.1} parent=0 // pred_fallthru
    _
  // Predicated region
  $region10: #{data_embedding_forward.1} parent=0 // pred_check
    _
  $region11: #{data_embedding_forward.1} parent=0 // pred_check_branch
    %14 = sbr.rel (0) target = $region13
  $region12: #{data_embedding_forward.1} parent=0 // pred_region
    _
  $region13: #{data_embedding_forward.1} parent=0 // pred_fallthru
    _
  // Predicated region
  $region14: #{data_embedding_forward.1} parent=0 // pred_check
    _
  $region15: #{data_embedding_forward.1} parent=0 // pred_check_branch
    %16 = sbr.rel (0) target = $region17
  $region16: #{data_embedding_forward.1} parent=0 // pred_region
    _
  $region17: #{data_embedding_forward.1} parent=0 // pred_fallthru
    _
  %v17 = vld [vmem:[%s0] sm:$0xff]
  %v18 = vld [vmem:[%s0 + $0x8] sm:$0xff]
  %v19 = vld [vmem:[%s0 + $0x10] sm:$0xff]
  %v20 = vld [vmem:[%s0 + $0x18] sm:$0xff]
  %v21 = vld [vmem:[%s1] sm:$0xff]
  %v22 = vld [vmem:[%s1 + $0x8] sm:$0xff]
  %v23 = vld [vmem:[%s1 + $0x10] sm:$0xff]
  %v24 = vld [vmem:[%s1 + $0x18] sm:$0xff]
  %v25 = vld [vmem:[%s1 + $0x20] sm:$0xff]
  %v26 = vld [vmem:[%s1 + $0x28] sm:$0xff]
  %v27 = vld [vmem:[%s1 + $0x30] sm:$0xff]
  %v28 = vld [vmem:[%s1 + $0x38] sm:$0xff]
  %v29 = vld [vmem:[%s2] sm:$0x1]
  %v31 = vlaneseq
  %v32 = vshrl.u32 %v31, 7
  %v33 = vsub.s32 0, %v32
  %v34 = vrot.slane %v29, %v33
  %vm36 = vcmask 523264
  %v38 = vsel %vm36, %v17, 0
  %v41 = vsel %vm36, %v18, 0
  %v44 = vsel %vm36, %v19, 0
  %v47 = vsel %vm36, %v20, 0
  %49 = vmatprep.subr.mxu0 0.0
  %50 = vmatpush1.msra.mxu0 0.0
  %51 = vmatprep.subr.mxu0 0.0
  %52 = vmatpush1.msra.mxu0 0.0
  %53 = vmatprep.subr.mxu0 0.0
  %54 = vmatpush1.msra.mxu0 0.0
  %55 = vmatprep.subr.mxu0 0.0
  %56 = vmatpush1.msra.mxu0 0.0
  %57 = vmatprep.subr.mxu0 0.0
  %58 = vmatpush1.msra.mxu0 0.0
  %59 = vmatprep.subr.mxu0 0.0
  %60 = vmatpush1.msra.mxu0 0.0
  %61 = vmatprep.subr.mxu0 0.0
  %62 = vmatpush1.msra.mxu0 0.0
  %63 = vmatprep.subr.mxu0 0.0
  %64 = vmatpush1.msra.mxu0 0.0
  %65 = vmatprep.subr.mxu0 0.0
  %66 = vmatpush1.msra.mxu0 %v28
  %67 = vmatprep.subr.mxu0 0.0
  %68 = vmatpush1.msra.mxu0 %v27
  %69 = vmatprep.subr.mxu0 0.0
  %70 = vmatpush1.msra.mxu0 %v26
  %71 = vmatprep.subr.mxu0 0.0
  %72 = vmatpush1.msra.mxu0 %v25
  %73 = vmatprep.subr.mxu0 0.0
  %74 = vmatpush1.msra.mxu0 %v24
  %75 = vmatprep.subr.mxu0 0.0
  %76 = vmatpush1.msra.mxu0 %v23
  %77 = vmatprep.subr.mxu0 0.0
  %78 = vmatpush1.msra.mxu0 %v22
  %79 = vmatprep.subr.mxu0 0.0
  %80 = vmatpush1.msra.mxu0 %v21
  %81 = vmatprep.subr.mxu0 0.0
  %82 = vmatpush2.msra.mxu0 0.0
  %83 = vmatprep.subr.mxu0 0.0
  %84 = vmatpush2.msra.mxu0 0.0
  %85 = vmatprep.subr.mxu0 0.0
  %86 = vmatpush2.msra.mxu0 0.0
  %87 = vmatprep.subr.mxu0 0.0
  %88 = vmatpush2.msra.mxu0 0.0
  %89 = vmatprep.subr.mxu0 0.0
  %90 = vmatpush2.msra.mxu0 0.0
  %91 = vmatprep.subr.mxu0 0.0
  %92 = vmatpush2.msra.mxu0 0.0
  %93 = vmatprep.subr.mxu0 0.0
  %94 = vmatpush2.msra.mxu0 0.0
  %95 = vmatprep.subr.mxu0 0.0
  %96 = vmatpush2.msra.mxu0 0.0
  %97 = vmatprep.subr.mxu0 0.0
  %98 = vmatpush2.msra.mxu0 0.0
  %99 = vmatprep.subr.mxu0 0.0
  %100 = vmatpush2.msra.mxu0 0.0
  %101 = vmatprep.subr.mxu0 0.0
  %102 = vmatpush2.msra.mxu0 0.0
  %103 = vmatprep.subr.mxu0 0.0
  %104 = vmatpush2.msra.mxu0 0.0
  %105 = vmatprep.subr.mxu0 0.0
  %106 = vmatpush2.msra.mxu0 0.0
  %107 = vmatprep.subr.mxu0 0.0
  %108 = vmatpush2.msra.mxu0 0.0
  %109 = vmatprep.subr.mxu0 0.0
  %110 = vmatpush2.msra.mxu0 0.0
  %111 = vmatprep.subr.mxu0 0.0
  %112 = vmatpush2.msra.mxu0 0.0
  %113 = vmatprep.mubr.f32.mxu0 0.0
  %114 = vmatmul.mubr.f32.gmra.mxu0 %v38
  %v115 = vpop.f32.mrf.mxu0
  %v116 = vadd.f32 %v34, %v115
  %v117 = vpop.f32.mrf.mxu0
  %118 = vmatprep.mubr.f32.mxu0 0.0
  %119 = vmatmul.mubr.f32.gmra.mxu0 %v41
  %v120 = vpop.f32.mrf.mxu0
  %v121 = vadd.f32 %v34, %v120
  %v122 = vpop.f32.mrf.mxu0
  %123 = vmatprep.mubr.f32.mxu0 0.0
  %124 = vmatmul.mubr.f32.gmra.mxu0 %v44
  %v125 = vpop.f32.mrf.mxu0
  %v126 = vadd.f32 %v34, %v125
  %v127 = vpop.f32.mrf.mxu0
  %128 = vmatprep.mubr.f32.mxu0 0.0
  %129 = vmatmul.mubr.f32.gmra.mxu0 %v47
  %v130 = vpop.f32.mrf.mxu0
  %v131 = vadd.f32 %v34, %v130
  %v132 = vpop.f32.mrf.mxu0
  %133 = vdwg.mxu0
  %v134 = vld [vmem:[%s3] sm:$0xff]
  %v135 = vld [vmem:[%s3 + $0x8] sm:$0xff]
  %v136 = vld [vmem:[%s3 + $0x10] sm:$0xff]
  %v137 = vld [vmem:[%s3 + $0x18] sm:$0xff]
  %v138 = vadd.f32 %v116, %v134
  %v139 = vadd.f32 %v121, %v135
  %v140 = vadd.f32 %v126, %v136
  %v141 = vadd.f32 %v131, %v137
  %142 = vst [vmem:[%s4] sm:$0xff] %v138
  %143 = vst [vmem:[%s4 + $0x8] sm:$0xff] %v139
  %144 = vst [vmem:[%s4 + $0x10] sm:$0xff] %v140
  %145 = vst [vmem:[%s4 + $0x18] sm:$0xff] %v141
  // Predicated region
  $region18: #{data_embedding_forward.1} parent=0 // pred_check
    _
  $region19: #{data_embedding_forward.1} parent=0 // pred_check_branch
    %147 = sbr.rel (0) target = $region21
  $region20: #{data_embedding_forward.1} parent=0 // pred_region
    _
  $region21: #{data_embedding_forward.1} parent=0 // pred_fallthru
    _
  // Predicated region
  $region22: #{data_embedding_forward.1} parent=0 // pred_check
    _
  $region23: #{data_embedding_forward.1} parent=0 // pred_check_branch
    %149 = sbr.rel (0) target = $region25
  $region24: #{data_embedding_forward.1} parent=0 // pred_region
    _
  $region25: #{data_embedding_forward.1} parent=0 // pred_fallthru
    _

</llo_original>
